<compile_context>
chip_gen: v6e
topology: v6e:2x2x1
jax: 0.10.0
libtpu: 0.0.40
codegen_flags: <defaults>
</compile_context>

<pallas_src>
import functools

import jax
import jax.numpy as jnp
from jax.experimental import pallas as pl
from jax.experimental.pallas import tpu as pltpu

_MiB = 1024 * 1024


# ----------------------------------------------------------------------------
# Tiling helpers
# ----------------------------------------------------------------------------
def _round_up(a, b):
    return (a + b - 1) // b * b


def _block_budget_bytes():
    """Generation-aware per-block budget (~VMEM/16, clamped to [2, 6] MiB).
    v7x (64 MiB VMEM) -> 4 MiB blocks; v5e/v6e (128 MiB) -> 6 MiB blocks."""
    try:
        info = pltpu.get_tpu_info()
        vmem = int(getattr(info, "vmem_capacity_bytes", 64 * _MiB))
    except Exception:  # pragma: no cover - non-TPU / older runtimes
        vmem = 64 * _MiB
    return int(min(max(vmem // 16, 2 * _MiB), 6 * _MiB))


def _choose_tiles(R, S, itemsize, budget_bytes):
    """Pick (tR, tS) for a (R, S) array.

    tR: full row extent when small or when R is not sublane-aligned (block ==
        full dim is always legal); otherwise a fixed multiple of 8 and the
        cdiv grid handles the row tail.
    tS: largest multiple of 128 whose (tR, tS) block fits the budget, clamped
        to the lane-padded spatial extent.  Never falls back to an unaligned
        full-S block; tail lanes are masked in the stats kernel and discarded
        by the partial write-back in the norm kernel.
    """
    if R <= 1024 or R % 8 != 0:
        tR = R
    else:
        tR = 512
    s_pad = _round_up(S, 128)
    tS = max(128, (budget_bytes // max(tR * itemsize, 1)) // 128 * 128)
    tS = min(tS, s_pad)
    return tR, tS


# ----------------------------------------------------------------------------
# Pallas kernels
# ----------------------------------------------------------------------------
def _stats_kernel(x_ref, out_ref, *, S, tS, Th):
    # x_ref: (tR, tS) spatial tile of a row block.
    # out_ref: (1, tR, 2) accumulator, resident across the last grid axis.
    p = pl.program_id(1)
    t = pl.program_id(2)
    s_idx = p * Th + t                                   # global spatial tile index

    xf = x_ref[...].astype(jnp.float32)                  # (tR, tS)
    lane = jax.lax.broadcasted_iota(jnp.int32, xf.shape, dimension=1)
    pos = s_idx * tS + lane
    # Mask padded tail lanes and the (clamped) duplicated out-of-range tile.
    xf = jnp.where(pos < S, xf, 0.0)

    s_sum = jnp.sum(xf, axis=-1, keepdims=True)          # (tR, 1)
    s_sq = jnp.sum(xf * xf, axis=-1, keepdims=True)      # (tR, 1)
    # Merge both reductions into one (1, tR, 2) slab without a lane concat.
    out_lane = jax.lax.broadcasted_iota(jnp.int32, out_ref.shape, dimension=2)
    part = jnp.where(out_lane == 0, s_sum[None, :, :], s_sq[None, :, :])

    @pl.when(t == 0)
    def _():
        out_ref[...] = part

    @pl.when(t != 0)
    def _():
        out_ref[...] = out_ref[...] + part


def _norm_kernel(x_ref, ss_ref, y_ref):
    # x_ref/y_ref: (tR, tS); ss_ref: (tR, 2) packed per-row (scale, shift).
    xf = x_ref[...].astype(jnp.float32)
    scale = ss_ref[:, 0:1]                                # (tR, 1)
    shift = ss_ref[:, 1:2]                                # (tR, 1)
    y_ref[...] = (xf * scale + shift).astype(y_ref.dtype)


# ----------------------------------------------------------------------------
# Pallas wrappers
# ----------------------------------------------------------------------------
def _per_row_sums(x2):
    """x2: (R, S) -> (sum over S, sum of squares over S), each (R,) f32."""
    R, S = x2.shape
    itemsize = x2.dtype.itemsize
    budget = _block_budget_bytes()
    tR, tS = _choose_tiles(R, S, itemsize, budget)
    T = pl.cdiv(S, tS)
    # 2-way spatial split keeps both v7x TensorCores busy for small batches;
    # neutral on v5e/v6e (single TC).  Skip it when there is only one tile.
    P = 2 if T >= 2 else 1
    Th = pl.cdiv(T, P)

    blk = tR * tS * itemsize
    # x double-buffered + resident accumulator blocks + headroom.
    vmem_limit = int(2 * blk + 2 * (tR * 2 * 4) + 8 * _MiB)

    kernel = functools.partial(_stats_kernel, S=S, tS=tS, Th=Th)
    # NOTE: on v7x one could additionally deepen the x pipeline with
    # pipeline_mode=pl.Buffered(3); left at the default depth here.
    stats = pl.pallas_call(
        kernel,
        out_shape=jax.ShapeDtypeStruct((P, R, 2), jnp.float32),
        grid=(pl.cdiv(R, tR), P, Th),
        in_specs=[pl.BlockSpec(
            (tR, tS),
            # Clamp the spatial block index; the dummy (duplicated) tile of an
            # odd split is fully masked to zero inside the kernel.
            lambda r, p, t: (r, jnp.minimum(p * Th + t, T - 1)))],
        out_specs=pl.BlockSpec((1, tR, 2), lambda r, p, t: (p, r, 0)),
        compiler_params=pltpu.CompilerParams(
            dimension_semantics=("parallel", "parallel", "arbitrary"),
            vmem_limit_bytes=vmem_limit),
        cost_estimate=pl.CostEstimate(
            flops=3 * R * S,
            transcendentals=0,
            bytes_accessed=R * S * itemsize + P * R * 2 * 4),
    )(x2)
    stats = stats.sum(axis=0)          # fold the megacore split halves (O(R))
    return stats[:, 0], stats[:, 1]


def _normalize(x2, ss):
    """x2: (R, S); ss: (R, 2) packed per-row (scale, shift) f32."""
    R, S = x2.shape
    itemsize = x2.dtype.itemsize
    budget = _block_budget_bytes()
    tR, tS = _choose_tiles(R, S, itemsize, budget)
    T = pl.cdiv(S, tS)

    blk = tR * tS * itemsize
    # x + y double-buffered + tiny param blocks + headroom.
    vmem_limit = int(4 * blk + 2 * (tR * 2 * 4) + 8 * _MiB)

    return pl.pallas_call(
        _norm_kernel,
        out_shape=jax.ShapeDtypeStruct((R, S), x2.dtype),
        grid=(pl.cdiv(R, tR), T),
        in_specs=[pl.BlockSpec((tR, tS), lambda r, t: (r, t)),
                  pl.BlockSpec((tR, 2), lambda r, t: (r, 0))],
        out_specs=pl.BlockSpec((tR, tS), lambda r, t: (r, t)),
        compiler_params=pltpu.CompilerParams(
            dimension_semantics=("parallel", "parallel"),
            vmem_limit_bytes=vmem_limit),
        cost_estimate=pl.CostEstimate(
            flops=2 * R * S,
            transcendentals=0,
            bytes_accessed=2 * R * S * itemsize + R * 2 * 4),
    )(x2, ss)


# ----------------------------------------------------------------------------
# MSAutoDIAL forward (training-mode statistics, functional buffer update)
# ----------------------------------------------------------------------------
@functools.partial(jax.jit, static_argnames=("num_domains", "training", "eps", "momentum"))
def msautodial_forward(x, set_id, alpha, weight, bias,
                       running_mean, running_var, running_num,
                       *, num_domains, training=True, eps=1e-5, momentum=0.1):
    N, C, H, W = x.shape
    S = H * W
    R = N * C
    # Fold N into the sublane axis: keeps vregs dense even when C < 8 and
    # reads x in its native dtype (bf16 inputs halve the HBM traffic floor).
    x2 = x.reshape(R, S)
    alpha = jnp.clip(alpha, 0.0, 1.0)        # torch: alpha.clamp_(0, 1)
    mom = 1.0 - momentum                     # torch: self.momentum = 1 - momentum

    if training:
        # --- per-(sample, channel) spatial moments (Pallas reduction kernel) ---
        sum_x, sum_x2 = _per_row_sums(x2)              # (R,) each, f32
        mean_nc = (sum_x / S).reshape(N, C)            # E_s[x]
        msq_nc = (sum_x2 / S).reshape(N, C)            # E_s[x^2]

        # --- per-domain aggregation (index_add semantics, tiny) ---
        onehot = jax.nn.one_hot(set_id, num_domains, dtype=jnp.float32)   # (N, D)
        count_d = onehot.sum(axis=0)                                      # (D,)
        # torch: clamp(1/count, max=1); guarded form avoids generating inf.
        inv_cnt = jnp.where(count_d > 0, 1.0 / jnp.maximum(count_d, 1.0), 1.0)
        mean_d = (onehot.T @ mean_nc) * inv_cnt[:, None]                  # (D, C)
        msq_d = (onehot.T @ msq_nc) * inv_cnt[:, None]
        # NOTE: one-pass variance E[x^2]-E[x]^2 in f32 can lose precision when
        # |mean| >> std; algebraically equal to the torch two-pass formula.
        var_d = msq_d - mean_d ** 2

        mean_g = jnp.mean(mean_nc, axis=0)                                # (C,)
        var_g = jnp.mean(msq_nc, axis=0) - mean_g ** 2                    # (C,)

        # --- running-buffer update (no_grad section, returned functionally) ---
        count = jnp.concatenate([count_d.sum().reshape(1), count_d])      # (D+1,)
        mean_cat = jnp.concatenate([mean_g[None, :], mean_d], axis=0)     # (D+1, C)
        var_cat = jnp.concatenate([var_g[None, :], var_d], axis=0)
        c_s = count * S
        # torch: clamp(c_s/(c_s-1), max=2); guarded against c_s <= 1.
        var_norm = jnp.where(c_s > 1.0,
                             jnp.minimum(c_s / jnp.maximum(c_s - 1.0, 1.0), 2.0),
                             jnp.where(c_s > 0.0, 2.0, 0.0))
        new_num = running_num * mom + count
        new_mean = running_mean * mom + count[:, None] * mean_cat
        new_var = running_var * mom + count[:, None] * var_cat * var_norm[:, None]
    else:
        # Same division-by-zero hazard as the PyTorch module for never-updated
        # domains (running_num == 0 at initialization).
        mean_all = running_mean / running_num[:, None]
        var_all = running_var / running_num[:, None]
        mean_g, mean_d = mean_all[0], mean_all[1:]
        var_g, var_d = var_all[0], var_all[1:]
        new_mean, new_var, new_num = running_mean, running_var, running_num

    # --- AutoDIAL mixing of domain / global statistics ---
    mean_mix = mean_d * alpha + mean_g[None, :] * (1.0 - alpha)                       # (D, C)
    var_mix = (var_d * alpha + var_g[None, :] * (1.0 - alpha)
               + alpha * (1.0 - alpha) * (mean_g[None, :] - mean_d) ** 2)             # (D, C)

    mean_ns = mean_mix[set_id]                                # (N, C) per-sample mean
    inv_ns = jax.lax.rsqrt(var_mix[set_id] + eps)             # (N, C) per-sample inv-std

    # --- fold affine into packed per-row (scale, shift) (O(N*C) glue) ---
    # y = (x - mean) * inv * w + b  ==  x * scale + shift
    scale_ns = inv_ns * weight[None, :].astype(jnp.float32)
    shift_ns = bias[None, :].astype(jnp.float32) - mean_ns * scale_ns
    ss = jnp.stack([scale_ns, shift_ns], axis=-1).reshape(R, 2).astype(jnp.float32)

    # --- elementwise normalization (Pallas kernel, single FMA per element) ---
    y2 = _normalize(x2, ss)
    y = y2.reshape(N, C, H, W)
    return y, (new_mean, new_var, new_num)


# ----------------------------------------------------------------------------
# Pure-JAX reference following the PyTorch algorithm literally
# ----------------------------------------------------------------------------
def reference_forward(x, set_id, alpha, weight, bias, num_domains, eps=1e-5):
    N, C, H, W = x.shape
    xm = x.reshape(N, C, -1).mean(-1)                                   # (N, C)
    onehot = jax.nn.one_hot(set_id, num_domains, dtype=jnp.float32)
    count_d = onehot.sum(0)
    inv_cnt = jnp.where(count_d > 0, 1.0 / jnp.maximum(count_d, 1.0), 1.0)
    mean_d = (onehot.T @ xm) * inv_cnt[:, None]
    dev = (x - mean_d[set_id][:, :, None, None]) ** 2
    var_d = (onehot.T @ dev.reshape(N, C, -1).mean(-1)) * inv_cnt[:, None]
    mean_g = xm.mean(0)
    var_g = ((x - mean_g[None, :, None, None]) ** 2).reshape(N, C, -1).mean(-1).mean(0)
    a = jnp.clip(alpha, 0.0, 1.0)
    mean = mean_d * a + mean_g[None, :] * (1 - a)
    var = var_d * a + var_g[None, :] * (1 - a) + a * (1 - a) * (mean_g[None, :] - mean_d) ** 2
    y = (x - mean[set_id][:, :, None, None]) * jax.lax.rsqrt(var[set_id] + eps)[:, :, None, None]
    return y * weight[None, :, None, None] + bias[None, :, None, None]


if __name__ == "__main__":
    # Small shapes consistent with the module: batch=2, channels=4, spatial=16x16.
    N, C, H, W = 2, 4, 16, 16
    D = 3  # num_domains

    key = jax.random.PRNGKey(0)
    kx, kw = jax.random.split(key)
    x = jax.random.normal(kx, (N, C, H, W), dtype=jnp.float32) * 2.0 + 0.5
    set_id = jnp.array([0, 2], dtype=jnp.int32)           # domain id per sample

    # Parameters per __init__ shapes (deterministic; alpha != 1 to exercise the blend).
    alpha = jnp.float32(0.7)
    weight = jax.random.uniform(kw, (C,), dtype=jnp.float32)   # weight.uniform_()
    bias = jnp.zeros((C,), jnp.float32)                        # bias.zero_()
    running_mean = jnp.zeros((D + 1, C), jnp.float32)
    running_var = jnp.zeros((D + 1, C), jnp.float32)
    running_num = jnp.zeros((D + 1,), jnp.float32)

    y, (new_rm, new_rv, new_rn) = msautodial_forward(
        x, set_id, alpha, weight, bias,
        running_mean, running_var, running_num,
        num_domains=D, training=True)
    jax.block_until_ready(y)

    y_ref = reference_forward(x, set_id, alpha, weight, bias, D)
    assert y.shape == (N, C, H, W)
    assert jnp.allclose(y, y_ref, atol=1e-3, rtol=1e-3), float(jnp.max(jnp.abs(y - y_ref)))

    print("KERNEL_OK")
</pallas_src>

<mosaic_0001>
module attributes {stable_mosaic.version = 11 : i64} {
  func.func @_stats_kernel(%arg0: i32, %arg1: i32, %arg2: i32, %arg3: memref<8x256xf32, #tpu.memory_space<vmem>>, %arg4: memref<1x8x2xf32, #tpu.memory_space<vmem>>) attributes {dimension_semantics = [#tpu.dimension_semantics<parallel>, #tpu.dimension_semantics<parallel>, #tpu.dimension_semantics<arbitrary>], iteration_bounds = array<i64: 1, 1, 1>, scalar_prefetch = 0 : i64, scratch_operands = 0 : i64, tpu.core_type = #tpu.core_type<tc>, window_params = [{transform_indices = @transform_0, window_bounds = array<i64: 8, 256>}, {transform_indices = @transform_1, window_bounds = array<i64: 1, 8, 2>}]} {
    %c1_i32 = arith.constant 1 : i32
    %0 = arith.muli %arg1, %c1_i32 : i32
    %1 = arith.addi %0, %arg2 : i32
    %c0 = arith.constant 0 : index
    %c0_0 = arith.constant 0 : index
    %2 = vector.load %arg3[%c0, %c0_0] : memref<8x256xf32, #tpu.memory_space<vmem>>, vector<8x256xf32>
    %3 = tpu.iota {dimensions = array<i32: 1>} : vector<8x256xi32>
    %c256_i32 = arith.constant 256 : i32
    %4 = arith.muli %1, %c256_i32 : i32
    %5 = vector.broadcast %4 : i32 to vector<8x256xi32>
    %6 = arith.addi %5, %3 : vector<8x256xi32>
    %c256_i32_1 = arith.constant 256 : i32
    %7 = vector.broadcast %c256_i32_1 : i32 to vector<8x256xi32>
    %8 = arith.cmpi slt, %6, %7 : vector<8x256xi32>
    %cst = arith.constant 0.000000e+00 : f32
    %9 = vector.broadcast %cst : f32 to vector<8x256xf32>
    %10 = arith.select %8, %2, %9 : vector<8x256xi1>, vector<8x256xf32>
    %cst_2 = arith.constant dense<0.000000e+00> : vector<8xf32>
    %11 = vector.multi_reduction <add>, %10, %cst_2 [1] : vector<8x256xf32> to vector<8xf32>
    %12 = vector.shape_cast %11 : vector<8xf32> to vector<8x1xf32>
    %13 = arith.mulf %10, %10 : vector<8x256xf32>
    %cst_3 = arith.constant dense<0.000000e+00> : vector<8xf32>
    %14 = vector.multi_reduction <add>, %13, %cst_3 [1] : vector<8x256xf32> to vector<8xf32>
    %15 = vector.shape_cast %14 : vector<8xf32> to vector<8x1xf32>
    %16 = tpu.iota {dimensions = array<i32: 2>} : vector<1x8x2xi32>
    %c0_i32 = arith.constant 0 : i32
    %17 = vector.broadcast %c0_i32 : i32 to vector<1x8x2xi32>
    %18 = arith.cmpi eq, %16, %17 : vector<1x8x2xi32>
    %19 = vector.shape_cast %12 : vector<8x1xf32> to vector<1x8x1xf32>
    %20 = vector.shape_cast %15 : vector<8x1xf32> to vector<1x8x1xf32>
    %21 = vector.shape_cast %19 : vector<1x8x1xf32> to vector<1x8x1xf32>
    %22 = vector.broadcast %21 : vector<1x8x1xf32> to vector<1x8x2xf32>
    %23 = vector.shape_cast %20 : vector<1x8x1xf32> to vector<1x8x1xf32>
    %24 = vector.broadcast %23 : vector<1x8x1xf32> to vector<1x8x2xf32>
    %25 = arith.select %18, %22, %24 : vector<1x8x2xi1>, vector<1x8x2xf32>
    %c0_i32_4 = arith.constant 0 : i32
    %26 = arith.cmpi eq, %arg2, %c0_i32_4 : i32
    %27 = arith.extui %26 : i1 to i32
    %c0_i32_5 = arith.constant 0 : i32
    %28 = arith.cmpi ne, %27, %c0_i32_5 : i32
    scf.if %28 {
      %c0_8 = arith.constant 0 : index
      %c0_9 = arith.constant 0 : index
      %c0_10 = arith.constant 0 : index
      %32 = vector.load %arg4[%c0_8, %c0_9, %c0_10] : memref<1x8x2xf32, #tpu.memory_space<vmem>>, vector<1x8x2xf32>
      tpu.vector_store %arg4[%c0_8, %c0_9, %c0_10], %25 {strides = array<i32>} : memref<1x8x2xf32, #tpu.memory_space<vmem>>, vector<1x8x2xf32>,
    } else {
    }
    %c0_i32_6 = arith.constant 0 : i32
    %29 = arith.cmpi ne, %arg2, %c0_i32_6 : i32
    %30 = arith.extui %29 : i1 to i32
    %c0_i32_7 = arith.constant 0 : i32
    %31 = arith.cmpi ne, %30, %c0_i32_7 : i32
    scf.if %31 {
      %c0_8 = arith.constant 0 : index
      %c0_9 = arith.constant 0 : index
      %c0_10 = arith.constant 0 : index
      %32 = vector.load %arg4[%c0_8, %c0_9, %c0_10] : memref<1x8x2xf32, #tpu.memory_space<vmem>>, vector<1x8x2xf32>
      %33 = arith.addf %32, %25 : vector<1x8x2xf32>
      %c0_11 = arith.constant 0 : index
      %c0_12 = arith.constant 0 : index
      %c0_13 = arith.constant 0 : index
      %34 = vector.load %arg4[%c0_11, %c0_12, %c0_13] : memref<1x8x2xf32, #tpu.memory_space<vmem>>, vector<1x8x2xf32>
      tpu.vector_store %arg4[%c0_11, %c0_12, %c0_13], %33 {strides = array<i32>} : memref<1x8x2xf32, #tpu.memory_space<vmem>>, vector<1x8x2xf32>,
    } else {
    }
    return
  }
  func.func @transform_0(%arg0: i32, %arg1: i32, %arg2: i32) -> (i32, i32) {
    %c1_i32 = arith.constant 1 : i32
    %0 = arith.muli %arg1, %c1_i32 : i32
    %1 = arith.addi %0, %arg2 : i32
    %c0_i32 = arith.constant 0 : i32
    %2 = arith.minsi %1, %c0_i32 : i32
    %c0_i32_0 = arith.constant 0 : i32
    return %arg0, %2 : i32, i32
  }
  func.func @transform_1(%arg0: i32, %arg1: i32, %arg2: i32) -> (i32, i32, i32) {
    %c0_i32 = arith.constant 0 : i32
    %c0_i32_0 = arith.constant 0 : i32
    return %arg1, %arg0, %c0_i32 : i32, i32, i32
  }
}

module attributes {stable_mosaic.version = 11 : i64} {
  func.func @_norm_kernel(%arg0: i32, %arg1: i32, %arg2: memref<8x256xf32, #tpu.memory_space<vmem>>, %arg3: memref<8x2xf32, #tpu.memory_space<vmem>>, %arg4: memref<8x256xf32, #tpu.memory_space<vmem>>) attributes {dimension_semantics = [#tpu.dimension_semantics<parallel>, #tpu.dimension_semantics<parallel>], iteration_bounds = array<i64: 1, 1>, scalar_prefetch = 0 : i64, scratch_operands = 0 : i64, tpu.core_type = #tpu.core_type<tc>, window_params = [{transform_indices = @transform_0, window_bounds = array<i64: 8, 256>}, {transform_indices = @transform_1, window_bounds = array<i64: 8, 2>}, {transform_indices = @transform_2, window_bounds = array<i64: 8, 256>}]} {
    %c0 = arith.constant 0 : index
    %c0_0 = arith.constant 0 : index
    %0 = vector.load %arg2[%c0, %c0_0] : memref<8x256xf32, #tpu.memory_space<vmem>>, vector<8x256xf32>
    %c0_1 = arith.constant 0 : index
    %c0_2 = arith.constant 0 : index
    %1 = vector.load %arg3[%c0_1, %c0_2] : memref<8x2xf32, #tpu.memory_space<vmem>>, vector<8x1xf32>
    %c0_3 = arith.constant 0 : index
    %c1 = arith.constant 1 : index
    %2 = vector.load %arg3[%c0_3, %c1] : memref<8x2xf32, #tpu.memory_space<vmem>>, vector<8x1xf32>
    %3 = vector.broadcast %1 : vector<8x1xf32> to vector<8x256xf32>
    %4 = arith.mulf %0, %3 : vector<8x256xf32>
    %5 = vector.broadcast %2 : vector<8x1xf32> to vector<8x256xf32>
    %6 = arith.addf %4, %5 : vector<8x256xf32>
    %c0_4 = arith.constant 0 : index
    %c0_5 = arith.constant 0 : index
    %7 = vector.load %arg4[%c0_4, %c0_5] : memref<8x256xf32, #tpu.memory_space<vmem>>, vector<8x256xf32>
    tpu.vector_store %arg4[%c0_4, %c0_5], %6 {strides = array<i32>} : memref<8x256xf32, #tpu.memory_space<vmem>>, vector<8x256xf32>,
    return
  }
  func.func @transform_0(%arg0: i32, %arg1: i32) -> (i32, i32) {
    %c0_i32 = arith.constant 0 : i32
    return %arg0, %arg1 : i32, i32
  }
  func.func @transform_1(%arg0: i32, %arg1: i32) -> (i32, i32) {
    %c0_i32 = arith.constant 0 : i32
    %c0_i32_0 = arith.constant 0 : i32
    return %arg0, %c0_i32 : i32, i32
  }
  func.func @transform_2(%arg0: i32, %arg1: i32) -> (i32, i32) {
    %c0_i32 = arith.constant 0 : i32
    return %arg0, %arg1 : i32, i32
  }
}

</mosaic_0001>

<llo_original>
// kernel: msautodial_forward.2
$region0: #{msautodial_forward.2}
  #allocation0 [shape = 'u32[]', space=smem, size = 0x4, offset = 0x4, fixed_abs, tag = 'smem constant byte address 0x4 - core index']
  #allocation1 [shape = 'u32[144,128]{1,0:T(1,128)}', space=vmem, size = 0x12000, scoped, tag = 'internal scratch']
  %s0 = inlined_call_operand.vmem [shape: f32[8,256], index: 0, kind: input, shape index: {}]
  %s1 = inlined_call_operand.vmem [shape: f32[1,8,2], index: 1, kind: output, shape index: {}]
  %s2 = sld [smem:[#allocation0]]
  $region22: #{msautodial_forward.2} parent=0
    _
  %s4 = ssub.s32 1, %s2
  %s5 = scalar_select 0, %s4, %s2
  // Predicated region
  $region2: #{msautodial_forward.2} parent=0 // pred_check
    _
  $region3: #{msautodial_forward.2} parent=0 // pred_check_branch
    %7 = sbr.rel (0) target = $region5
  $region4: #{msautodial_forward.2} parent=0 // pred_region
    %s8 = sadd.s32 0, 0
    %p9 = scmp.lt.s32.totalorder %s8, 0
    %s10 = scalar_select %p9, %s8, 0
    %s11 = smul.u32 2, %s10
    %p12 = scmp.lt.s32.totalorder %s11, 1
    %s13 = scalar_select %p12, %s11, 1
    %s14 = smul.addr %s13, 8
    %s15 = scalar_lea.vmem %s0, %s14
    %s16 = sadd.s32 0, 0
    %p17 = scmp.lt.s32.totalorder %s16, 0
    %s18 = scalar_select %p17, %s16, 0
    %s19 = smul.u32 2, %s18
  $region5: #{msautodial_forward.2} parent=0 // pred_fallthru
    _
  %s20 = sadd.s32 0, 0
  %p21 = scmp.lt.s32.totalorder %s20, 0
  %s22 = scalar_select %p21, %s20, 0
  %s23 = smul.u32 2, %s22
  %p24 = scmp.lt.s32.totalorder %s23, 1
  %s25 = scalar_select %p24, %s23, 1
  %s26 = smul.addr %s25, 8
  %s27 = scalar_lea.vmem %s0, %s26
  %s28 = sadd.s32 0, 0
  %p29 = scmp.lt.s32.totalorder %s28, 0
  %s30 = scalar_select %p29, %s28, 0
  %s31 = smul.u32 2, %s30
  %p32 = scmp.lt.s32.totalorder %s31, 1
  %s33 = scalar_select %p32, %s31, 1
  %s34 = smul.addr %s33, 8
  %s35 = scalar_lea.vmem %s0, %s34
  %s36 = sadd.s32 0, 0
  %p37 = scmp.lt.s32.totalorder %s36, 0
  %s38 = scalar_select %p37, %s36, 0
  %s39 = smul.u32 2, %s38
  %s40 = sadd.s32 0, 0
  %v41 = vld [vmem:[%s35] sm:$0xff]
  %v42 = vld [vmem:[%s35 + $0x8] sm:$0xff]
  %v43 = vlaneseq
  %v44 = vand.u32 %v43, 127
  %v45 = vadd.s32 %v44, 128
  %s46 = smul.u32 %s40, 256
  %v47 = vstv %s46
  %v48 = vadd.s32 %v47, %v44
  %v49 = vadd.s32 %v47, %v45
  %vm50 = vcmp.lt.s32.totalorder %v48, 256
  %vm51 = vcmp.lt.s32.totalorder %v49, 256
  %v52 = vsel %vm50, %v41, 0.0
  %v53 = vsel %vm51, %v42, 0.0
  %v54 = vadd.f32 %v52, %v53
  %55 = vadd.xlane.f32.xlu0 %v54
  %v56 = vpop.xlane.xlu0 %55
  %v57 = vmul.f32 %v52, %v52
  %v58 = vmul.f32 %v53, %v53
  %v59 = vadd.f32 %v57, %v58
  %60 = vadd.xlane.f32.xlu0 %v59
  %v61 = vpop.xlane.xlu0 %60
  %vm62 = vcmp.eq.s32.totalorder %v44, 0
  %v63 = vsel %vm62, %v56, %v61
  %p64 = scmp.eq.s32.totalorder 0, 0
  // Predicated region
  $region6: #{msautodial_forward.2} parent=0 // pred_check
    %p65 = pneg %p64
  $region7: #{msautodial_forward.2} parent=0 // pred_check_branch
    %67 = sbr.rel (%p65) target = $region9
  $region8: #{msautodial_forward.2} parent=0 // pred_region
    %vm68 = vcmask 15360
    %69 = vst.msk [vmem:[%s1] sm:$0xff] %vm68, %v63
  $region9: #{msautodial_forward.2} parent=0 // pred_fallthru
    _
  %p70 = scmp.ne.s32.totalorder 0, 0
  // Predicated region
  $region10: #{msautodial_forward.2} parent=0 // pred_check
    %p71 = pneg %p70
  $region11: #{msautodial_forward.2} parent=0 // pred_check_branch
    %73 = sbr.rel (%p71) target = $region13
  $region12: #{msautodial_forward.2} parent=0 // pred_region
    %v74 = vld [vmem:[%s1] sm:$0xff]
    %v75 = vadd.f32 %v74, %v63
    %vm76 = vcmask 15360
    %77 = vst.msk [vmem:[%s1] sm:$0xff] %vm76, %v75
  $region13: #{msautodial_forward.2} parent=0 // pred_fallthru
    _
  // Predicated region
  $region14: #{msautodial_forward.2} parent=0 // pred_check
    _
  $region15: #{msautodial_forward.2} parent=0 // pred_check_branch
    %79 = sbr.rel (0) target = $region17
  $region16: #{msautodial_forward.2} parent=0 // pred_region
    _
  $region17: #{msautodial_forward.2} parent=0 // pred_fallthru
    _
  // Predicated region
  $region18: #{msautodial_forward.2} parent=0 // pred_check
    _
  $region19: #{msautodial_forward.2} parent=0 // pred_check_branch
    %81 = sbr.rel (0) target = $region21
  $region20: #{msautodial_forward.2} parent=0 // pred_region
    _
  $region21: #{msautodial_forward.2} parent=0 // pred_fallthru
    _

// kernel: msautodial_forward.3
$region0: #{msautodial_forward.3}
  #allocation0 [shape = 'u32[]', space=smem, size = 0x4, offset = 0x4, fixed_abs, tag = 'smem constant byte address 0x4 - core index']
  #allocation1 [shape = 'u32[144,128]{1,0:T(1,128)}', space=vmem, size = 0x12000, scoped, tag = 'internal scratch']
  %s0 = inlined_call_operand.vmem [shape: f32[8,256], index: 0, kind: input, shape index: {}]
  %s1 = inlined_call_operand.vmem [shape: f32[8,2], index: 1, kind: input, shape index: {}]
  %s2 = inlined_call_operand.vmem [shape: f32[8,256], index: 2, kind: output, shape index: {}]
  %s3 = sld [smem:[#allocation0]]
  $region18: #{msautodial_forward.3} parent=0
    _
  %s5 = ssub.s32 1, %s3
  %s6 = scalar_select 0, %s5, %s3
  // Predicated region
  $region2: #{msautodial_forward.3} parent=0 // pred_check
    _
  $region3: #{msautodial_forward.3} parent=0 // pred_check_branch
    %8 = sbr.rel (0) target = $region5
  $region4: #{msautodial_forward.3} parent=0 // pred_region
    _
  $region5: #{msautodial_forward.3} parent=0 // pred_fallthru
    _
  // Predicated region
  $region6: #{msautodial_forward.3} parent=0 // pred_check
    _
  $region7: #{msautodial_forward.3} parent=0 // pred_check_branch
    %10 = sbr.rel (0) target = $region9
  $region8: #{msautodial_forward.3} parent=0 // pred_region
    _
  $region9: #{msautodial_forward.3} parent=0 // pred_fallthru
    _
  %v11 = vld [vmem:[%s0] sm:$0xff]
  %v12 = vld [vmem:[%s0 + $0x8] sm:$0xff]
  %v13 = vld [vmem:[%s1] sm:$0xff]
  %15 = vset.pattern.permute.xlu0 0
  %16 = vperm.xlu0 %15, %v13
  %v17 = vpop.permute.xlu0 %16
  %v19 = vmul.f32 %v11, %v17
  %v20 = vmul.f32 %v12, %v17
  %21 = vset.pattern.permute.xlu0 1
  %22 = vperm.xlu0 %21, %v13
  %v23 = vpop.permute.xlu0 %22
  %v25 = vadd.f32 %v19, %v23
  %v26 = vadd.f32 %v20, %v23
  %27 = vst [vmem:[%s2] sm:$0xff] %v25
  %28 = vst [vmem:[%s2 + $0x8] sm:$0xff] %v26
  // Predicated region
  $region10: #{msautodial_forward.3} parent=0 // pred_check
    _
  $region11: #{msautodial_forward.3} parent=0 // pred_check_branch
    %30 = sbr.rel (0) target = $region13
  $region12: #{msautodial_forward.3} parent=0 // pred_region
    _
  $region13: #{msautodial_forward.3} parent=0 // pred_fallthru
    _
  // Predicated region
  $region14: #{msautodial_forward.3} parent=0 // pred_check
    _
  $region15: #{msautodial_forward.3} parent=0 // pred_check_branch
    %32 = sbr.rel (0) target = $region17
  $region16: #{msautodial_forward.3} parent=0 // pred_region
    _
  $region17: #{msautodial_forward.3} parent=0 // pred_fallthru
    _

</llo_original>
